<compile_context>
chip_gen: v7x
topology: tpu7x:2x2x1
jax: 0.10.0
libtpu: 0.0.40
codegen_flags: <defaults>
</compile_context>

<pallas_src>
import functools

import jax
import jax.numpy as jnp
import numpy as np
from jax.experimental import pallas as pl
from jax.experimental.pallas import tpu as pltpu


def _round_up(x, m):
    return ((x + m - 1) // m) * m


def _cnn_seq2seq_kernel(src_ref, tgt_ref,
                        w_enc_ref, b_enc_ref,
                        w_dec_c_ref, w_dec_e_ref, b_dec_ref,
                        w_fc_ref, b_fc_ref,
                        out_ref, *, K):
    """One block of Bblk batch elements per grid step.

    src_ref     : (Bblk, S+K-1, Ep)  bf16  zero-padded (time & lane) src emb
    tgt_ref     : (Bblk, S+K-1, Ep)  bf16  zero-padded (time & lane) tgt emb
    w_enc_ref   : (K*Ep, Cp)         bf16  encoder conv weight, im2col layout
    b_enc_ref   : (1, Cp)            f32
    w_dec_c_ref : (K*Cp, Cp)         bf16  decoder weight, encoder-channel half
    w_dec_e_ref : (K*Ep, Cp)         bf16  decoder weight, target-embed half
    b_dec_ref   : (1, Cp)            f32
    w_fc_ref    : (Cp, Vp)           bf16
    b_fc_ref    : (1, Vp)            f32
    out_ref     : (Bblk, S, Vp)      f32
    """
    Bblk, S, Vp = out_ref.shape
    Cp = w_fc_ref.shape[0]
    pad = K // 2
    rows = Bblk * S

    def im2col(x):
        # x: (Bblk, S + K - 1, F) -> (Bblk*S, K*F).
        # Per-batch time slices are taken BEFORE flattening so conv taps do
        # not cross batch boundaries.  Lane-dim concat with F % 128 == 0.
        F = x.shape[-1]
        cols = jnp.concatenate([x[:, k:k + S, :] for k in range(K)], axis=-1)
        return cols.reshape(rows, K * F)

    # ---- encoder Conv1d as one im2col matmul (bf16 x bf16 -> f32 acc) ----
    enc = jnp.dot(im2col(src_ref[...]), w_enc_ref[...],
                  preferred_element_type=jnp.float32)
    enc = enc + b_enc_ref[...]

    # Zero-time-pad the encoder activations per batch element (registers,
    # lane-aligned; no VMEM scratch, no cross-iteration state).
    enc_bf = enc.astype(jnp.bfloat16).reshape(Bblk, S, Cp)
    zpad = jnp.zeros((Bblk, pad, Cp), jnp.bfloat16)
    enc_p = jnp.concatenate([zpad, enc_bf, zpad], axis=1)  # (Bblk, S+K-1, Cp)

    # ---- decoder Conv1d split along input channels: enc half + tgt half ----
    dec = jnp.dot(im2col(enc_p), w_dec_c_ref[...],
                  preferred_element_type=jnp.float32)
    dec = dec + jnp.dot(im2col(tgt_ref[...]), w_dec_e_ref[...],
                        preferred_element_type=jnp.float32)
    dec = dec + b_dec_ref[...]

    # ---- fc_out Linear ----
    out = jnp.dot(dec.astype(jnp.bfloat16), w_fc_ref[...],
                  preferred_element_type=jnp.float32)
    out = out + b_fc_ref[...]
    out_ref[...] = out.reshape(Bblk, S, Vp).astype(out_ref.dtype)


def cnn_seq2seq_forward(src, tgt, params, *, kernel_size, block_rows=256,
                        vmem_budget_bytes=48 * 1024 * 1024):
    """Pallas implementation of CNNSeq2Seq.forward.

    src: (B, S_src) int32 tokens, tgt: (B, S_tgt) int32 tokens.
    Returns (B, S_src, output_dim) float32 logits.
    """
    K = kernel_size
    assert K % 2 == 1, "kernel assumes odd Conv1d kernel (same-length output)"
    pad = K // 2

    emb_src = params["emb_src"]          # (input_dim, E)
    emb_tgt = params["emb_tgt"]          # (output_dim, E)
    w_enc = params["w_enc"]              # (C, E, K)   -- PyTorch layout
    b_enc = params["b_enc"]              # (C,)
    w_dec = params["w_dec"]              # (C, C+E, K)
    b_dec = params["b_dec"]              # (C,)
    w_fc = params["w_fc"]                # (V, C)
    b_fc = params["b_fc"]                # (V,)

    B, S = src.shape
    E = emb_src.shape[1]
    C = w_enc.shape[0]
    V = w_fc.shape[0]
    Sp = S + K - 1

    # Lane-pad feature dims to multiples of 128 (padded cols are zero and are
    # sliced off / contribute nothing).
    Ep = _round_up(E, 128)
    Cp = _round_up(C, 128)
    Vp = _round_up(V, 128)

    # Batch blocking: aim for ~block_rows matmul rows per grid step, capped by
    # a rough VMEM budget (double-buffered inputs/output + resident weights).
    weight_bytes = (K * Ep * Cp + K * Cp * Cp + K * Ep * Cp + Cp * Vp) * 2 \
        + (2 * Cp + Vp) * 4
    per_batch_bytes = 2 * (2 * Sp * Ep * 2) + 2 * (S * Vp * 4)  # src+tgt+out
    budget = max(vmem_budget_bytes - weight_bytes, per_batch_bytes)
    bblk_vmem_cap = max(1, budget // per_batch_bytes)
    Bblk = max(1, min(B, block_rows // max(S, 1), bblk_vmem_cap))
    Bp = pl.cdiv(B, Bblk) * Bblk

    # ---- glue: embedding lookups (gather) in (batch, time, feature) ----
    src_emb = jnp.take(emb_src, src, axis=0)                 # (B, S, E)
    tgt_emb = jnp.take(emb_tgt, tgt, axis=0)                 # (B, S_tgt, E)

    # torch: truncate tgt to encoder length, zero-pad if shorter
    tgt_emb = tgt_emb[:, :S, :]
    if tgt_emb.shape[1] < S:
        tgt_emb = jnp.pad(tgt_emb,
                          ((0, 0), (0, S - tgt_emb.shape[1]), (0, 0)))

    # Zero-pad: batch -> Bp, time -> Sp ("same" conv), feature -> Ep. bf16.
    src_p = jnp.pad(src_emb, ((0, Bp - B), (pad, pad), (0, Ep - E))
                    ).astype(jnp.bfloat16)
    tgt_p = jnp.pad(tgt_emb, ((0, Bp - B), (pad, pad), (0, Ep - E))
                    ).astype(jnp.bfloat16)

    # ---- glue: repack weights tap-major im2col layout, lane-padded, bf16 ----
    w_enc_t = jnp.transpose(w_enc, (2, 1, 0))                      # (K, E, C)
    w_enc_f = jnp.pad(w_enc_t, ((0, 0), (0, Ep - E), (0, Cp - C))
                      ).reshape(K * Ep, Cp).astype(jnp.bfloat16)

    w_dec_t = jnp.transpose(w_dec, (2, 1, 0))                      # (K, C+E, C)
    w_dec_c = jnp.pad(w_dec_t[:, :C, :], ((0, 0), (0, Cp - C), (0, Cp - C))
                      ).reshape(K * Cp, Cp).astype(jnp.bfloat16)
    w_dec_e = jnp.pad(w_dec_t[:, C:, :], ((0, 0), (0, Ep - E), (0, Cp - C))
                      ).reshape(K * Ep, Cp).astype(jnp.bfloat16)

    w_fc_t = jnp.pad(jnp.transpose(w_fc, (1, 0)),
                     ((0, Cp - C), (0, Vp - V))).astype(jnp.bfloat16)
    b_enc_r = jnp.pad(b_enc, (0, Cp - C)).reshape(1, Cp).astype(jnp.float32)
    b_dec_r = jnp.pad(b_dec, (0, Cp - C)).reshape(1, Cp).astype(jnp.float32)
    b_fc_r = jnp.pad(b_fc, (0, Vp - V)).reshape(1, Vp).astype(jnp.float32)

    grid = (Bp // Bblk,)
    grid_spec = pltpu.PrefetchScalarGridSpec(
        num_scalar_prefetch=0,
        grid=grid,
        in_specs=[
            pl.BlockSpec((Bblk, Sp, Ep), lambda b: (b, 0, 0)),   # src (padded)
            pl.BlockSpec((Bblk, Sp, Ep), lambda b: (b, 0, 0)),   # tgt (padded)
            pl.BlockSpec((K * Ep, Cp), lambda b: (0, 0)),        # w_enc im2col
            pl.BlockSpec((1, Cp), lambda b: (0, 0)),             # b_enc
            pl.BlockSpec((K * Cp, Cp), lambda b: (0, 0)),        # w_dec (enc)
            pl.BlockSpec((K * Ep, Cp), lambda b: (0, 0)),        # w_dec (tgt)
            pl.BlockSpec((1, Cp), lambda b: (0, 0)),             # b_dec
            pl.BlockSpec((Cp, Vp), lambda b: (0, 0)),            # w_fc
            pl.BlockSpec((1, Vp), lambda b: (0, 0)),             # b_fc
        ],
        out_specs=pl.BlockSpec((Bblk, S, Vp), lambda b: (b, 0, 0)),
    )

    flops = 2 * Bp * S * (K * Ep * Cp        # encoder conv
                          + K * Cp * Cp      # decoder conv, enc half
                          + K * Ep * Cp      # decoder conv, tgt half
                          + Cp * Vp)         # fc_out
    bytes_accessed = (
        2 * (Bp * Sp * Ep) * 2               # src_p + tgt_p (bf16)
        + (K * Ep * Cp + K * Cp * Cp + K * Ep * Cp + Cp * Vp) * 2   # weights
        + (2 * Cp + Vp) * 4                  # biases (f32)
        + Bp * S * Vp * 4)                   # output (f32)
    cost = pl.CostEstimate(flops=flops, transcendentals=0,
                           bytes_accessed=bytes_accessed)

    out = pl.pallas_call(
        functools.partial(_cnn_seq2seq_kernel, K=K),
        out_shape=jax.ShapeDtypeStruct((Bp, S, Vp), jnp.float32),
        grid_spec=grid_spec,
        compiler_params=pltpu.CompilerParams(
            dimension_semantics=("parallel",)),   # batch axis is independent
        cost_estimate=cost,
    )(src_p, tgt_p, w_enc_f, b_enc_r, w_dec_c, w_dec_e, b_dec_r,
      w_fc_t, b_fc_r)

    return out[:B, :, :V]


def _reference_forward(src, tgt, params, *, kernel_size):
    """Pure-JAX f32 reference matching the PyTorch module."""
    K = kernel_size
    pad = K // 2
    emb_src = params["emb_src"]
    emb_tgt = params["emb_tgt"]

    src_emb = jnp.take(emb_src, src, axis=0)            # (B, S, E)
    tgt_emb = jnp.take(emb_tgt, tgt, axis=0)            # (B, St, E)

    def conv1d(x_btf, w_oik, b_o):
        xp = jnp.pad(x_btf, ((0, 0), (pad, pad), (0, 0)))
        T = x_btf.shape[1]
        out = b_o[None, None, :]
        for k in range(K):
            out = out + jnp.einsum("btc,oc->bto", xp[:, k:k + T, :],
                                   w_oik[:, :, k])
        return out

    enc = conv1d(src_emb, params["w_enc"], params["b_enc"])   # (B, S, C)
    S = enc.shape[1]
    tgt_emb = tgt_emb[:, :S, :]
    if tgt_emb.shape[1] < S:
        tgt_emb = jnp.pad(tgt_emb,
                          ((0, 0), (0, S - tgt_emb.shape[1]), (0, 0)))
    dec_in = jnp.concatenate([enc, tgt_emb], axis=-1)         # (B, S, C+E)
    dec = conv1d(dec_in, params["w_dec"], params["b_dec"])    # (B, S, C)
    return jnp.einsum("btc,vc->btv", dec, params["w_fc"]) + params["b_fc"]


def init_params(key, input_dim, output_dim, embed_dim, kernel_size,
                num_channels):
    ks = jax.random.split(key, 8)
    C, E, K, V = num_channels, embed_dim, kernel_size, output_dim
    s = 0.1
    return {
        "emb_src": jax.random.normal(ks[0], (input_dim, E), jnp.float32) * s,
        "emb_tgt": jax.random.normal(ks[1], (output_dim, E), jnp.float32) * s,
        "w_enc": jax.random.normal(ks[2], (C, E, K), jnp.float32) * s,
        "b_enc": jax.random.normal(ks[3], (C,), jnp.float32) * s,
        "w_dec": jax.random.normal(ks[4], (C, C + E, K), jnp.float32) * s,
        "b_dec": jax.random.normal(ks[5], (C,), jnp.float32) * s,
        "w_fc": jax.random.normal(ks[6], (V, C), jnp.float32) * s,
        "b_fc": jax.random.normal(ks[7], (V,), jnp.float32) * s,
    }


if __name__ == "__main__":
    # Small config consistent with the module
    input_dim, output_dim = 16, 12
    embed_dim, kernel_size, num_channels = 32, 3, 32
    B, S_src, S_tgt = 2, 8, 10

    key = jax.random.PRNGKey(0)
    k_params, k_src, k_tgt = jax.random.split(key, 3)

    params = init_params(k_params, input_dim, output_dim, embed_dim,
                         kernel_size, num_channels)
    src = jax.random.randint(k_src, (B, S_src), 0, input_dim, jnp.int32)
    tgt = jax.random.randint(k_tgt, (B, S_tgt), 0, output_dim, jnp.int32)

    fwd = jax.jit(functools.partial(cnn_seq2seq_forward,
                                    kernel_size=kernel_size))
    out = fwd(src, tgt, params)
    out = jax.block_until_ready(out)

    ref = _reference_forward(src, tgt, params, kernel_size=kernel_size)
    # bf16 operands (f32 accumulation) -> loosened tolerance vs f32 reference.
    np.testing.assert_allclose(np.asarray(out), np.asarray(ref),
                               rtol=2e-2, atol=2e-2)
    assert out.shape == (B, S_src, output_dim)
    print("KERNEL_OK")
</pallas_src>

<mosaic_0001>
module attributes {stable_mosaic.version = 11 : i64} {
  func.func @_cnn_seq2seq_kernel(%arg0: i32, %arg1: memref<2x10x128xbf16, #tpu.memory_space<vmem>>, %arg2: memref<2x10x128xbf16, #tpu.memory_space<vmem>>, %arg3: memref<384x128xbf16, #tpu.memory_space<vmem>>, %arg4: memref<1x128xf32, #tpu.memory_space<vmem>>, %arg5: memref<384x128xbf16, #tpu.memory_space<vmem>>, %arg6: memref<384x128xbf16, #tpu.memory_space<vmem>>, %arg7: memref<1x128xf32, #tpu.memory_space<vmem>>, %arg8: memref<128x128xbf16, #tpu.memory_space<vmem>>, %arg9: memref<1x128xf32, #tpu.memory_space<vmem>>, %arg10: memref<2x8x128xf32, #tpu.memory_space<vmem>>) attributes {dimension_semantics = [#tpu.dimension_semantics<parallel>], iteration_bounds = array<i64: 1>, scalar_prefetch = 0 : i64, scratch_operands = 0 : i64, tpu.core_type = #tpu.core_type<tc>, window_params = [{transform_indices = @transform_0, window_bounds = array<i64: 2, 10, 128>}, {transform_indices = @transform_1, window_bounds = array<i64: 2, 10, 128>}, {pipeline_mode = #tpu.pipeline_mode<synchronous>, transform_indices = @transform_2, window_bounds = array<i64: 384, 128>}, {pipeline_mode = #tpu.pipeline_mode<synchronous>, transform_indices = @transform_3, window_bounds = array<i64: 1, 128>}, {pipeline_mode = #tpu.pipeline_mode<synchronous>, transform_indices = @transform_4, window_bounds = array<i64: 384, 128>}, {pipeline_mode = #tpu.pipeline_mode<synchronous>, transform_indices = @transform_5, window_bounds = array<i64: 384, 128>}, {pipeline_mode = #tpu.pipeline_mode<synchronous>, transform_indices = @transform_6, window_bounds = array<i64: 1, 128>}, {pipeline_mode = #tpu.pipeline_mode<synchronous>, transform_indices = @transform_7, window_bounds = array<i64: 128, 128>}, {pipeline_mode = #tpu.pipeline_mode<synchronous>, transform_indices = @transform_8, window_bounds = array<i64: 1, 128>}, {transform_indices = @transform_9, window_bounds = array<i64: 2, 8, 128>}]} {
    %c0 = arith.constant 0 : index
    %c0_0 = arith.constant 0 : index
    %c0_1 = arith.constant 0 : index
    %0 = vector.load %arg1[%c0, %c0_0, %c0_1] : memref<2x10x128xbf16, #tpu.memory_space<vmem>>, vector<2x10x128xbf16>
    %1 = vector.extract_strided_slice %0 {offsets = [0, 0, 0], sizes = [2, 8, 128], strides = [1, 1, 1]} : vector<2x10x128xbf16> to vector<2x8x128xbf16>
    %2 = vector.extract_strided_slice %0 {offsets = [0, 1, 0], sizes = [2, 8, 128], strides = [1, 1, 1]} : vector<2x10x128xbf16> to vector<2x8x128xbf16>
    %3 = vector.extract_strided_slice %0 {offsets = [0, 2, 0], sizes = [2, 8, 128], strides = [1, 1, 1]} : vector<2x10x128xbf16> to vector<2x8x128xbf16>
    %4 = tpu.concatenate %1, %2, %3 in 2 : vector<2x8x128xbf16>, vector<2x8x128xbf16>, vector<2x8x128xbf16> -> vector<2x8x384xbf16>
    %5 = vector.shape_cast %4 : vector<2x8x384xbf16> to vector<16x384xbf16>
    %c0_2 = arith.constant 0 : index
    %c0_3 = arith.constant 0 : index
    %6 = vector.load %arg3[%c0_2, %c0_3] : memref<384x128xbf16, #tpu.memory_space<vmem>>, vector<384x128xbf16>
    %cst = arith.constant dense<0.000000e+00> : vector<16x128xf32>
    %7 = tpu.matmul %5, %6, %cst {dimension_numbers = #tpu.dot_dimension_numbers<[1], [0], [0], [1], [0, 0, 1, 1], [], []>} : vector<16x384xbf16>, vector<384x128xbf16>, vector<16x128xf32> -> vector<16x128xf32>
    %c0_4 = arith.constant 0 : index
    %c0_5 = arith.constant 0 : index
    %8 = vector.load %arg4[%c0_4, %c0_5] : memref<1x128xf32, #tpu.memory_space<vmem>>, vector<1x128xf32>
    %9 = vector.broadcast %8 : vector<1x128xf32> to vector<16x128xf32>
    %10 = arith.addf %7, %9 : vector<16x128xf32>
    %11 = arith.truncf %10 : vector<16x128xf32> to vector<16x128xbf16>
    %12 = vector.shape_cast %11 : vector<16x128xbf16> to vector<2x8x128xbf16>
    %cst_6 = arith.constant 0.000000e+00 : bf16
    %13 = vector.broadcast %cst_6 : bf16 to vector<2x1x128xbf16>
    %14 = tpu.concatenate %13, %12, %13 in 1 : vector<2x1x128xbf16>, vector<2x8x128xbf16>, vector<2x1x128xbf16> -> vector<2x10x128xbf16>
    %15 = vector.extract_strided_slice %14 {offsets = [0, 0, 0], sizes = [2, 8, 128], strides = [1, 1, 1]} : vector<2x10x128xbf16> to vector<2x8x128xbf16>
    %16 = vector.extract_strided_slice %14 {offsets = [0, 1, 0], sizes = [2, 8, 128], strides = [1, 1, 1]} : vector<2x10x128xbf16> to vector<2x8x128xbf16>
    %17 = vector.extract_strided_slice %14 {offsets = [0, 2, 0], sizes = [2, 8, 128], strides = [1, 1, 1]} : vector<2x10x128xbf16> to vector<2x8x128xbf16>
    %18 = tpu.concatenate %15, %16, %17 in 2 : vector<2x8x128xbf16>, vector<2x8x128xbf16>, vector<2x8x128xbf16> -> vector<2x8x384xbf16>
    %19 = vector.shape_cast %18 : vector<2x8x384xbf16> to vector<16x384xbf16>
    %c0_7 = arith.constant 0 : index
    %c0_8 = arith.constant 0 : index
    %20 = vector.load %arg5[%c0_7, %c0_8] : memref<384x128xbf16, #tpu.memory_space<vmem>>, vector<384x128xbf16>
    %cst_9 = arith.constant dense<0.000000e+00> : vector<16x128xf32>
    %21 = tpu.matmul %19, %20, %cst_9 {dimension_numbers = #tpu.dot_dimension_numbers<[1], [0], [0], [1], [0, 0, 1, 1], [], []>} : vector<16x384xbf16>, vector<384x128xbf16>, vector<16x128xf32> -> vector<16x128xf32>
    %c0_10 = arith.constant 0 : index
    %c0_11 = arith.constant 0 : index
    %c0_12 = arith.constant 0 : index
    %22 = vector.load %arg2[%c0_10, %c0_11, %c0_12] : memref<2x10x128xbf16, #tpu.memory_space<vmem>>, vector<2x10x128xbf16>
    %23 = vector.extract_strided_slice %22 {offsets = [0, 0, 0], sizes = [2, 8, 128], strides = [1, 1, 1]} : vector<2x10x128xbf16> to vector<2x8x128xbf16>
    %24 = vector.extract_strided_slice %22 {offsets = [0, 1, 0], sizes = [2, 8, 128], strides = [1, 1, 1]} : vector<2x10x128xbf16> to vector<2x8x128xbf16>
    %25 = vector.extract_strided_slice %22 {offsets = [0, 2, 0], sizes = [2, 8, 128], strides = [1, 1, 1]} : vector<2x10x128xbf16> to vector<2x8x128xbf16>
    %26 = tpu.concatenate %23, %24, %25 in 2 : vector<2x8x128xbf16>, vector<2x8x128xbf16>, vector<2x8x128xbf16> -> vector<2x8x384xbf16>
    %27 = vector.shape_cast %26 : vector<2x8x384xbf16> to vector<16x384xbf16>
    %c0_13 = arith.constant 0 : index
    %c0_14 = arith.constant 0 : index
    %28 = vector.load %arg6[%c0_13, %c0_14] : memref<384x128xbf16, #tpu.memory_space<vmem>>, vector<384x128xbf16>
    %cst_15 = arith.constant dense<0.000000e+00> : vector<16x128xf32>
    %29 = tpu.matmul %27, %28, %cst_15 {dimension_numbers = #tpu.dot_dimension_numbers<[1], [0], [0], [1], [0, 0, 1, 1], [], []>} : vector<16x384xbf16>, vector<384x128xbf16>, vector<16x128xf32> -> vector<16x128xf32>
    %30 = arith.addf %21, %29 : vector<16x128xf32>
    %c0_16 = arith.constant 0 : index
    %c0_17 = arith.constant 0 : index
    %31 = vector.load %arg7[%c0_16, %c0_17] : memref<1x128xf32, #tpu.memory_space<vmem>>, vector<1x128xf32>
    %32 = vector.broadcast %31 : vector<1x128xf32> to vector<16x128xf32>
    %33 = arith.addf %30, %32 : vector<16x128xf32>
    %34 = arith.truncf %33 : vector<16x128xf32> to vector<16x128xbf16>
    %c0_18 = arith.constant 0 : index
    %c0_19 = arith.constant 0 : index
    %35 = vector.load %arg8[%c0_18, %c0_19] : memref<128x128xbf16, #tpu.memory_space<vmem>>, vector<128x128xbf16>
    %cst_20 = arith.constant dense<0.000000e+00> : vector<16x128xf32>
    %36 = tpu.matmul %34, %35, %cst_20 {dimension_numbers = #tpu.dot_dimension_numbers<[1], [0], [0], [1], [0, 0, 1, 1], [], []>} : vector<16x128xbf16>, vector<128x128xbf16>, vector<16x128xf32> -> vector<16x128xf32>
    %c0_21 = arith.constant 0 : index
    %c0_22 = arith.constant 0 : index
    %37 = vector.load %arg9[%c0_21, %c0_22] : memref<1x128xf32, #tpu.memory_space<vmem>>, vector<1x128xf32>
    %38 = vector.broadcast %37 : vector<1x128xf32> to vector<16x128xf32>
    %39 = arith.addf %36, %38 : vector<16x128xf32>
    %40 = vector.shape_cast %39 : vector<16x128xf32> to vector<2x8x128xf32>
    %c0_23 = arith.constant 0 : index
    %c0_24 = arith.constant 0 : index
    %c0_25 = arith.constant 0 : index
    %41 = vector.load %arg10[%c0_23, %c0_24, %c0_25] : memref<2x8x128xf32, #tpu.memory_space<vmem>>, vector<2x8x128xf32>
    tpu.vector_store %arg10[%c0_23, %c0_24, %c0_25], %40 {strides = array<i32>} : memref<2x8x128xf32, #tpu.memory_space<vmem>>, vector<2x8x128xf32>,
    return
  }
  func.func @transform_0(%arg0: i32) -> (i32, i32, i32) {
    %c0_i32 = arith.constant 0 : i32
    %c0_i32_0 = arith.constant 0 : i32
    %c0_i32_1 = arith.constant 0 : i32
    return %arg0, %c0_i32, %c0_i32_0 : i32, i32, i32
  }
  func.func @transform_1(%arg0: i32) -> (i32, i32, i32) {
    %c0_i32 = arith.constant 0 : i32
    %c0_i32_0 = arith.constant 0 : i32
    %c0_i32_1 = arith.constant 0 : i32
    return %arg0, %c0_i32, %c0_i32_0 : i32, i32, i32
  }
  func.func @transform_2(%arg0: i32) -> (i32, i32) {
    %c0_i32 = arith.constant 0 : i32
    %c0_i32_0 = arith.constant 0 : i32
    %c0_i32_1 = arith.constant 0 : i32
    return %c0_i32, %c0_i32_0 : i32, i32
  }
  func.func @transform_3(%arg0: i32) -> (i32, i32) {
    %c0_i32 = arith.constant 0 : i32
    %c0_i32_0 = arith.constant 0 : i32
    %c0_i32_1 = arith.constant 0 : i32
    return %c0_i32, %c0_i32_0 : i32, i32
  }
  func.func @transform_4(%arg0: i32) -> (i32, i32) {
    %c0_i32 = arith.constant 0 : i32
    %c0_i32_0 = arith.constant 0 : i32
    %c0_i32_1 = arith.constant 0 : i32
    return %c0_i32, %c0_i32_0 : i32, i32
  }
  func.func @transform_5(%arg0: i32) -> (i32, i32) {
    %c0_i32 = arith.constant 0 : i32
    %c0_i32_0 = arith.constant 0 : i32
    %c0_i32_1 = arith.constant 0 : i32
    return %c0_i32, %c0_i32_0 : i32, i32
  }
  func.func @transform_6(%arg0: i32) -> (i32, i32) {
    %c0_i32 = arith.constant 0 : i32
    %c0_i32_0 = arith.constant 0 : i32
    %c0_i32_1 = arith.constant 0 : i32
    return %c0_i32, %c0_i32_0 : i32, i32
  }
  func.func @transform_7(%arg0: i32) -> (i32, i32) {
    %c0_i32 = arith.constant 0 : i32
    %c0_i32_0 = arith.constant 0 : i32
    %c0_i32_1 = arith.constant 0 : i32
    return %c0_i32, %c0_i32_0 : i32, i32
  }
  func.func @transform_8(%arg0: i32) -> (i32, i32) {
    %c0_i32 = arith.constant 0 : i32
    %c0_i32_0 = arith.constant 0 : i32
    %c0_i32_1 = arith.constant 0 : i32
    return %c0_i32, %c0_i32_0 : i32, i32
  }
  func.func @transform_9(%arg0: i32) -> (i32, i32, i32) {
    %c0_i32 = arith.constant 0 : i32
    %c0_i32_0 = arith.constant 0 : i32
    %c0_i32_1 = arith.constant 0 : i32
    return %arg0, %c0_i32, %c0_i32_0 : i32, i32, i32
  }
}

</mosaic_0001>

<llo_original>
// kernel: cnn_seq2seq_forward.1
$region0: #{cnn_seq2seq_forward.1}
  #allocation0 [shape = 'u32[]', space=smem, size = 0x4, offset = 0x4, fixed_abs, tag = 'smem constant byte address 0x4 - core index']
  #allocation1 [shape = 'u32[144,128]{1,0:T(1,128)}', space=vmem, size = 0x12000, scoped, tag = 'internal scratch']
  %s0 = inlined_call_operand.vmem [shape: bf16[2,10,128], index: 0, kind: input, shape index: {}]
  %s1 = inlined_call_operand.vmem [shape: bf16[2,10,128], index: 1, kind: input, shape index: {}]
  %s2 = inlined_call_operand.vmem [shape: bf16[384,128], index: 2, kind: input, shape index: {}]
  %s3 = inlined_call_operand.vmem [shape: f32[1,128], index: 3, kind: input, shape index: {}]
  %s4 = inlined_call_operand.vmem [shape: bf16[384,128], index: 4, kind: input, shape index: {}]
  %s5 = inlined_call_operand.vmem [shape: bf16[384,128], index: 5, kind: input, shape index: {}]
  %s6 = inlined_call_operand.vmem [shape: f32[1,128], index: 6, kind: input, shape index: {}]
  %s7 = inlined_call_operand.vmem [shape: bf16[128,128], index: 7, kind: input, shape index: {}]
  %s8 = inlined_call_operand.vmem [shape: f32[1,128], index: 8, kind: input, shape index: {}]
  %s9 = inlined_call_operand.hbm [shape: f32[2,8,128], index: 9, kind: output, shape index: {}]
  %s10 = sld [smem:[#allocation0]]
  $region46: #{cnn_seq2seq_forward.1} parent=0
    _
  %s12 = ssub.s32 1, %s10
  %s13 = scalar_select 0, %s12, %s10
  $region1: #{cnn_seq2seq_forward.1} parent=0
    #allocation2 [shape = 'u8[8192]{0}', space=vmem, size = 0x2000, scoped, tag = 'output window, operand 0, single buffered']
    #allocation3 [shape = 's32[1]{0}', space=sflag, size = 0x4, scoped, tag = 'scoped memory for cnn_seq2seq_forward.1']
    %14 = vsyncpa [#allocation3], 0
    // Predicated region
    $region2: #{cnn_seq2seq_forward.1} parent=1 // pred_check
      _
    $region3: #{cnn_seq2seq_forward.1} parent=1 // pred_check_branch
      %16 = sbr.rel (0) target = $region5
    $region4: #{cnn_seq2seq_forward.1} parent=1 // pred_region
      _
    $region5: #{cnn_seq2seq_forward.1} parent=1 // pred_fallthru
      _
    // Predicated region
    $region6: #{cnn_seq2seq_forward.1} parent=1 // pred_check
      _
    $region7: #{cnn_seq2seq_forward.1} parent=1 // pred_check_branch
      %18 = sbr.rel (0) target = $region9
    $region8: #{cnn_seq2seq_forward.1} parent=1 // pred_region
      _
    $region9: #{cnn_seq2seq_forward.1} parent=1 // pred_fallthru
      _
    // Predicated region
    $region10: #{cnn_seq2seq_forward.1} parent=1 // pred_check
      _
    $region11: #{cnn_seq2seq_forward.1} parent=1 // pred_check_branch
      %20 = sbr.rel (0) target = $region13
    $region12: #{cnn_seq2seq_forward.1} parent=1 // pred_region
      _
    $region13: #{cnn_seq2seq_forward.1} parent=1 // pred_fallthru
      _
    // Predicated region
    $region14: #{cnn_seq2seq_forward.1} parent=1 // pred_check
      _
    $region15: #{cnn_seq2seq_forward.1} parent=1 // pred_check_branch
      %22 = sbr.rel (0) target = $region17
    $region16: #{cnn_seq2seq_forward.1} parent=1 // pred_region
      _
    $region17: #{cnn_seq2seq_forward.1} parent=1 // pred_fallthru
      _
    // Predicated region
    $region18: #{cnn_seq2seq_forward.1} parent=1 // pred_check
      _
    $region19: #{cnn_seq2seq_forward.1} parent=1 // pred_check_branch
      %24 = sbr.rel (0) target = $region21
    $region20: #{cnn_seq2seq_forward.1} parent=1 // pred_region
      _
    $region21: #{cnn_seq2seq_forward.1} parent=1 // pred_fallthru
      _
    // Predicated region
    $region22: #{cnn_seq2seq_forward.1} parent=1 // pred_check
      _
    $region23: #{cnn_seq2seq_forward.1} parent=1 // pred_check_branch
      %26 = sbr.rel (0) target = $region25
    $region24: #{cnn_seq2seq_forward.1} parent=1 // pred_region
      _
    $region25: #{cnn_seq2seq_forward.1} parent=1 // pred_fallthru
      _
    // Predicated region
    $region26: #{cnn_seq2seq_forward.1} parent=1 // pred_check
      _
    $region27: #{cnn_seq2seq_forward.1} parent=1 // pred_check_branch
      %28 = sbr.rel (0) target = $region29
    $region28: #{cnn_seq2seq_forward.1} parent=1 // pred_region
      _
    $region29: #{cnn_seq2seq_forward.1} parent=1 // pred_fallthru
      _
    // Predicated region
    $region30: #{cnn_seq2seq_forward.1} parent=1 // pred_check
      _
    $region31: #{cnn_seq2seq_forward.1} parent=1 // pred_check_branch
      %30 = sbr.rel (0) target = $region33
    $region32: #{cnn_seq2seq_forward.1} parent=1 // pred_region
      _
    $region33: #{cnn_seq2seq_forward.1} parent=1 // pred_fallthru
      _
    // Predicated region
    $region34: #{cnn_seq2seq_forward.1} parent=1 // pred_check
      _
    $region35: #{cnn_seq2seq_forward.1} parent=1 // pred_check_branch
      %32 = sbr.rel (0) target = $region37
    $region36: #{cnn_seq2seq_forward.1} parent=1 // pred_region
      _
    $region37: #{cnn_seq2seq_forward.1} parent=1 // pred_fallthru
      _
    %v34 = vld [vmem:[%s0] sm:$0xf]
    %v35 = vld [vmem:[%s0 + $0x4] sm:$0x1]
    %v36 = vld [vmem:[%s0 + $0x8] sm:$0xf]
    %v37 = vld [vmem:[%s0 + $0xc] sm:$0x1]
    %v42 = vunpack.c.l.b16 %v34
    %v43 = vunpack.c.l.b16 %v35
    %v44 = vunpack.c.l.b16 %v36
    %v45 = vunpack.c.l.b16 %v37
    %v46 = vpack.c.b16 %v43, %v42
    %v47 = vpack.c.b16 %v45, %v44
    %v49 = vshrl.u32 %v46, 16
    %v51 = vshll.u32 %v46, 16
    %v53 = vrot.slane %v51, 1
    %v54 = vor.u32 %v49, %v53
    %v56 = vshrl.u32 %v47, 16
    %v58 = vshll.u32 %v47, 16
    %v60 = vrot.slane %v58, 1
    %v61 = vor.u32 %v56, %v60
    %v62 = vrot.slane %v46, 1
    %v63 = vrot.slane %v47, 1
    %v64 = vunpack.c.l.b16 %v54
    %v65 = vunpack.c.l.b16 %v62
    %v66 = vunpack.c.l.b16 %v61
    %v67 = vunpack.c.l.b16 %v63
    %v68 = vld [vmem:[%s2] sm:$0xf]
    %v69 = vld [vmem:[%s2 + $0x4] sm:$0xf]
    %v70 = vld [vmem:[%s2 + $0x8] sm:$0xf]
    %v71 = vld [vmem:[%s2 + $0xc] sm:$0xf]
    %v72 = vld [vmem:[%s2 + $0x10] sm:$0xf]
    %v73 = vld [vmem:[%s2 + $0x14] sm:$0xf]
    %v74 = vld [vmem:[%s2 + $0x18] sm:$0xf]
    %v75 = vld [vmem:[%s2 + $0x1c] sm:$0xf]
    %v76 = vld [vmem:[%s2 + $0x20] sm:$0xf]
    %v77 = vld [vmem:[%s2 + $0x24] sm:$0xf]
    %v78 = vld [vmem:[%s2 + $0x28] sm:$0xf]
    %v79 = vld [vmem:[%s2 + $0x2c] sm:$0xf]
    %v80 = vld [vmem:[%s2 + $0x30] sm:$0xf]
    %v81 = vld [vmem:[%s2 + $0x34] sm:$0xf]
    %v82 = vld [vmem:[%s2 + $0x38] sm:$0xf]
    %v83 = vld [vmem:[%s2 + $0x3c] sm:$0xf]
    %v84 = vld [vmem:[%s2 + $0x40] sm:$0xf]
    %v85 = vld [vmem:[%s2 + $0x44] sm:$0xf]
    %v86 = vld [vmem:[%s2 + $0x48] sm:$0xf]
    %v87 = vld [vmem:[%s2 + $0x4c] sm:$0xf]
    %v88 = vld [vmem:[%s2 + $0x50] sm:$0xf]
    %v89 = vld [vmem:[%s2 + $0x54] sm:$0xf]
    %v90 = vld [vmem:[%s2 + $0x58] sm:$0xf]
    %v91 = vld [vmem:[%s2 + $0x5c] sm:$0xf]
    %v92 = vld [vmem:[%s2 + $0x60] sm:$0xf]
    %v93 = vld [vmem:[%s2 + $0x64] sm:$0xf]
    %v94 = vld [vmem:[%s2 + $0x68] sm:$0xf]
    %v95 = vld [vmem:[%s2 + $0x6c] sm:$0xf]
    %v96 = vld [vmem:[%s2 + $0x70] sm:$0xf]
    %v97 = vld [vmem:[%s2 + $0x74] sm:$0xf]
    %v98 = vld [vmem:[%s2 + $0x78] sm:$0xf]
    %v99 = vld [vmem:[%s2 + $0x7c] sm:$0xf]
    %v100 = vld [vmem:[%s2 + $0x80] sm:$0xf]
    %v101 = vld [vmem:[%s2 + $0x84] sm:$0xf]
    %v102 = vld [vmem:[%s2 + $0x88] sm:$0xf]
    %v103 = vld [vmem:[%s2 + $0x8c] sm:$0xf]
    %v104 = vld [vmem:[%s2 + $0x90] sm:$0xf]
    %v105 = vld [vmem:[%s2 + $0x94] sm:$0xf]
    %v106 = vld [vmem:[%s2 + $0x98] sm:$0xf]
    %v107 = vld [vmem:[%s2 + $0x9c] sm:$0xf]
    %v108 = vld [vmem:[%s2 + $0xa0] sm:$0xf]
    %v109 = vld [vmem:[%s2 + $0xa4] sm:$0xf]
    %v110 = vld [vmem:[%s2 + $0xa8] sm:$0xf]
    %v111 = vld [vmem:[%s2 + $0xac] sm:$0xf]
    %v112 = vld [vmem:[%s2 + $0xb0] sm:$0xf]
    %v113 = vld [vmem:[%s2 + $0xb4] sm:$0xf]
    %v114 = vld [vmem:[%s2 + $0xb8] sm:$0xf]
    %v115 = vld [vmem:[%s2 + $0xbc] sm:$0xf]
    %v116 = vld [vmem:[%s3] sm:$0x1]
    %v118 = vlaneseq
    %v119 = vshrl.u32 %v118, 7
    %v120 = vsub.s32 0, %v119
    %v121 = vrot.slane %v116, %v120
    %v123 = vpack.c.b16 %v44, %v42
    %v124 = vpack.c.b16 %v66, %v64
    %v125 = vpack.c.b16 %v67, %v65
    %v177 = vunpack.c.l.b16 %v68
    %v178 = vunpack.c.l.b16 %v69
    %v179 = vunpack.c.l.b16 %v70
    %v180 = vunpack.c.l.b16 %v71
    %v181 = vunpack.c.l.b16 %v72
    %v182 = vunpack.c.l.b16 %v73
    %v183 = vunpack.c.l.b16 %v74
    %v184 = vunpack.c.l.b16 %v75
    %v185 = vunpack.c.l.b16 %v76
    %v186 = vunpack.c.l.b16 %v77
    %v187 = vunpack.c.l.b16 %v78
    %v188 = vunpack.c.l.b16 %v79
    %v189 = vunpack.c.l.b16 %v80
    %v190 = vunpack.c.l.b16 %v81
    %v191 = vunpack.c.l.b16 %v82
    %v192 = vunpack.c.l.b16 %v83
    %v193 = vunpack.c.l.b16 %v84
    %v194 = vunpack.c.l.b16 %v85
    %v195 = vunpack.c.l.b16 %v86
    %v196 = vunpack.c.l.b16 %v87
    %v197 = vunpack.c.l.b16 %v88
    %v198 = vunpack.c.l.b16 %v89
    %v199 = vunpack.c.l.b16 %v90
    %v200 = vunpack.c.l.b16 %v91
    %v201 = vunpack.c.l.b16 %v92
    %v202 = vunpack.c.l.b16 %v93
    %v203 = vunpack.c.l.b16 %v94
    %v204 = vunpack.c.l.b16 %v95
    %v205 = vunpack.c.l.b16 %v96
    %v206 = vunpack.c.l.b16 %v97
    %v207 = vunpack.c.l.b16 %v98
    %v208 = vunpack.c.l.b16 %v99
    %v209 = vunpack.c.l.b16 %v100
    %v210 = vunpack.c.l.b16 %v101
    %v211 = vunpack.c.l.b16 %v102
    %v212 = vunpack.c.l.b16 %v103
    %v213 = vunpack.c.l.b16 %v104
    %v214 = vunpack.c.l.b16 %v105
    %v215 = vunpack.c.l.b16 %v106
    %v216 = vunpack.c.l.b16 %v107
    %v217 = vunpack.c.l.b16 %v108
    %v218 = vunpack.c.l.b16 %v109
    %v219 = vunpack.c.l.b16 %v110
    %v220 = vunpack.c.l.b16 %v111
    %v221 = vunpack.c.l.b16 %v112
    %v222 = vunpack.c.l.b16 %v113
    %v223 = vunpack.c.l.b16 %v114
    %v224 = vunpack.c.l.b16 %v115
    %v225 = vpack.c.b16 %v178, %v177
    %v226 = vpack.c.b16 %v180, %v179
    %v227 = vpack.c.b16 %v182, %v181
    %v228 = vpack.c.b16 %v184, %v183
    %v229 = vpack.c.b16 %v186, %v185
    %v230 = vpack.c.b16 %v188, %v187
    %v231 = vpack.c.b16 %v190, %v189
    %v232 = vpack.c.b16 %v192, %v191
    %v233 = vpack.c.b16 %v194, %v193
    %v234 = vpack.c.b16 %v196, %v195
    %v235 = vpack.c.b16 %v198, %v197
    %v236 = vpack.c.b16 %v200, %v199
    %v237 = vpack.c.b16 %v202, %v201
    %v238 = vpack.c.b16 %v204, %v203
    %v239 = vpack.c.b16 %v206, %v205
    %v240 = vpack.c.b16 %v208, %v207
    %v241 = vpack.c.b16 %v210, %v209
    %v242 = vpack.c.b16 %v212, %v211
    %v243 = vpack.c.b16 %v214, %v213
    %v244 = vpack.c.b16 %v216, %v215
    %v245 = vpack.c.b16 %v218, %v217
    %v246 = vpack.c.b16 %v220, %v219
    %v247 = vpack.c.b16 %v222, %v221
    %v248 = vpack.c.b16 %v224, %v223
    %273 = vmatprep.subr.bf16.mxu0 0
    %274 = vmatpush1.bf16.msra.mxu0 %v225
    %275 = vmatprep.subr.bf16.mxu0 0
    %276 = vmatpush1.bf16.msra.mxu0 %v226
    %277 = vmatprep.subr.bf16.mxu0 0
    %278 = vmatpush1.bf16.msra.mxu0 %v227
    %279 = vmatprep.subr.bf16.mxu0 0
    %280 = vmatpush1.bf16.msra.mxu0 %v228
    %281 = vmatprep.subr.bf16.mxu0 0
    %282 = vmatpush1.bf16.msra.mxu0 %v229
    %283 = vmatprep.subr.bf16.mxu0 0
    %284 = vmatpush1.bf16.msra.mxu0 %v230
    %285 = vmatprep.subr.bf16.mxu0 0
    %286 = vmatpush1.bf16.msra.mxu0 %v231
    %287 = vmatprep.subr.bf16.mxu0 0
    %288 = vmatpush1.bf16.msra.mxu0 %v232
    %289 = vmatprep.subr.bf16.mxu0 0
    %290 = vmatpush1.bf16.msra.mxu0 %v233
    %291 = vmatprep.subr.bf16.mxu0 0
    %292 = vmatpush1.bf16.msra.mxu0 %v234
    %293 = vmatprep.subr.bf16.mxu0 0
    %294 = vmatpush1.bf16.msra.mxu0 %v235
    %295 = vmatprep.subr.bf16.mxu0 0
    %296 = vmatpush1.bf16.msra.mxu0 %v236
    %297 = vmatprep.subr.bf16.mxu0 0
    %298 = vmatpush1.bf16.msra.mxu0 %v237
    %299 = vmatprep.subr.bf16.mxu0 0
    %300 = vmatpush1.bf16.msra.mxu0 %v238
    %301 = vmatprep.subr.bf16.mxu0 0
    %302 = vmatpush1.bf16.msra.mxu0 %v239
    %303 = vmatprep.subr.bf16.mxu0 0
    %304 = vmatpush1.bf16.msra.mxu0 %v240
    %305 = vmatprep.mubr.bf16.mxu0 %v124
    %306 = vmatmul.mubr.bf16.gmra.mrb[0].mxu0 %v123
    %v307 = vpop.f32.mrb[0].mxu0
    %v308 = vadd.f32 %v121, %v307
    %v309 = vpop.f32.mrb[0].mxu0
    %v310 = vpop.f32.mrb[0].mxu0
    %v311 = vadd.f32 %v121, %v310
    %v312 = vpop.f32.mrb[0].mxu0
    %313 = vdwg.mxu0
    %314 = vmatprep.subr.bf16.mxu0 0
    %315 = vmatpush1.bf16.msra.mxu0 %v241
    %316 = vmatprep.subr.bf16.mxu0 0
    %317 = vmatpush1.bf16.msra.mxu0 %v242
    %318 = vmatprep.subr.bf16.mxu0 0
    %319 = vmatpush1.bf16.msra.mxu0 %v243
    %320 = vmatprep.subr.bf16.mxu0 0
    %321 = vmatpush1.bf16.msra.mxu0 %v244
    %322 = vmatprep.subr.bf16.mxu0 0
    %323 = vmatpush1.bf16.msra.mxu0 %v245
    %324 = vmatprep.subr.bf16.mxu0 0
    %325 = vmatpush1.bf16.msra.mxu0 %v246
    %326 = vmatprep.subr.bf16.mxu0 0
    %327 = vmatpush1.bf16.msra.mxu0 %v247
    %328 = vmatprep.subr.bf16.mxu0 0
    %329 = vmatpush1.bf16.msra.mxu0 %v248
    %330 = vmatprep.subr.bf16.mxu0 0
    %331 = vmatpush1.bf16.msra.mxu0 0
    %332 = vmatprep.subr.bf16.mxu0 0
    %333 = vmatpush1.bf16.msra.mxu0 0
    %334 = vmatprep.subr.bf16.mxu0 0
    %335 = vmatpush1.bf16.msra.mxu0 0
    %336 = vmatprep.subr.bf16.mxu0 0
    %337 = vmatpush1.bf16.msra.mxu0 0
    %338 = vmatprep.subr.bf16.mxu0 0
    %339 = vmatpush1.bf16.msra.mxu0 0
    %340 = vmatprep.subr.bf16.mxu0 0
    %341 = vmatpush1.bf16.msra.mxu0 0
    %342 = vmatprep.subr.bf16.mxu0 0
    %343 = vmatpush1.bf16.msra.mxu0 0
    %344 = vmatprep.subr.bf16.mxu0 0
    %345 = vmatpush1.bf16.msra.mxu0 0
    %346 = vmatprep.mubr.bf16.mxu0 0
    %347 = vmatmul.mubr.bf16.gmra.mrb[0].mxu0 %v125
    %v348 = vpop.f32.mrb[0].mxu0
    %v349 = vadd.f32 %v308, %v348
    %v350 = vpop.f32.mrb[0].mxu0
    %v351 = vpop.f32.mrb[0].mxu0
    %v352 = vadd.f32 %v311, %v351
    %v353 = vpop.f32.mrb[0].mxu0
    %354 = vdwg.mxu0
    %v355 = vpack.c.bf16 %v352, %v349
    %v357 = vunpack.c.l.b16 %v355
    %v358 = vunpack.c.h.b16 %v355
    %v359 = vpack.c.b16 %v357, %v357
    %v360 = vpack.c.b16 %v358, %v358
    %v362 = vshrl.u32 %v359, 16
    %v364 = vrot.slane %v362, 7
    %v365 = vshll.u32 %v359, 16
    %v367 = vor.u32 %v364, %v365
    %v369 = vshrl.u32 %v360, 16
    %v371 = vrot.slane %v369, 7
    %v372 = vshll.u32 %v360, 16
    %v374 = vor.u32 %v371, %v372
    %vm377 = vcmask 1040384
    %vm378 = vsmask.f32 256
    %vm379 = vmand %vm377, %vm378
    %v380 = vsel %vm379, 0, %v367
    %v381 = vsel %vm379, 0, %v374
    %vm382 = vcmask 1044480
    %vm383 = vsmask.f32 4352
    %vm384 = vmand %vm382, %vm383
    %v385 = vsel %vm384, %v380, 0
    %v386 = vsel %vm384, %v381, 0
    %v388 = vshrl.u32 %v385, 16
    %v390 = vshll.u32 %v385, 16
    %v392 = vrot.slane %v390, 1
    %v393 = vor.u32 %v388, %v392
    %v395 = vshrl.u32 %v386, 16
    %v397 = vshll.u32 %v386, 16
    %v399 = vrot.slane %v397, 1
    %v400 = vor.u32 %v395, %v399
    %v403 = vrot.slane %v385, 1
    %v404 = vrot.slane %v386, 1
    %v405 = vunpack.c.l.b16 %v385
    %v406 = vunpack.c.l.b16 %v393
    %v407 = vunpack.c.l.b16 %v403
    %v408 = vunpack.c.l.b16 %v386
    %v409 = vunpack.c.l.b16 %v400
    %v410 = vunpack.c.l.b16 %v404
    %v411 = vld [vmem:[%s4] sm:$0xf]
    %v412 = vld [vmem:[%s4 + $0x4] sm:$0xf]
    %v413 = vld [vmem:[%s4 + $0x8] sm:$0xf]
    %v414 = vld [vmem:[%s4 + $0xc] sm:$0xf]
    %v415 = vld [vmem:[%s4 + $0x10] sm:$0xf]
    %v416 = vld [vmem:[%s4 + $0x14] sm:$0xf]
    %v417 = vld [vmem:[%s4 + $0x18] sm:$0xf]
    %v418 = vld [vmem:[%s4 + $0x1c] sm:$0xf]
    %v419 = vld [vmem:[%s4 + $0x20] sm:$0xf]
    %v420 = vld [vmem:[%s4 + $0x24] sm:$0xf]
    %v421 = vld [vmem:[%s4 + $0x28] sm:$0xf]
    %v422 = vld [vmem:[%s4 + $0x2c] sm:$0xf]
    %v423 = vld [vmem:[%s4 + $0x30] sm:$0xf]
    %v424 = vld [vmem:[%s4 + $0x34] sm:$0xf]
    %v425 = vld [vmem:[%s4 + $0x38] sm:$0xf]
    %v426 = vld [vmem:[%s4 + $0x3c] sm:$0xf]
    %v427 = vld [vmem:[%s4 + $0x40] sm:$0xf]
    %v428 = vld [vmem:[%s4 + $0x44] sm:$0xf]
    %v429 = vld [vmem:[%s4 + $0x48] sm:$0xf]
    %v430 = vld [vmem:[%s4 + $0x4c] sm:$0xf]
    %v431 = vld [vmem:[%s4 + $0x50] sm:$0xf]
    %v432 = vld [vmem:[%s4 + $0x54] sm:$0xf]
    %v433 = vld [vmem:[%s4 + $0x58] sm:$0xf]
    %v434 = vld [vmem:[%s4 + $0x5c] sm:$0xf]
    %v435 = vld [vmem:[%s4 + $0x60] sm:$0xf]
    %v436 = vld [vmem:[%s4 + $0x64] sm:$0xf]
    %v437 = vld [vmem:[%s4 + $0x68] sm:$0xf]
    %v438 = vld [vmem:[%s4 + $0x6c] sm:$0xf]
    %v439 = vld [vmem:[%s4 + $0x70] sm:$0xf]
    %v440 = vld [vmem:[%s4 + $0x74] sm:$0xf]
    %v441 = vld [vmem:[%s4 + $0x78] sm:$0xf]
    %v442 = vld [vmem:[%s4 + $0x7c] sm:$0xf]
    %v443 = vld [vmem:[%s4 + $0x80] sm:$0xf]
    %v444 = vld [vmem:[%s4 + $0x84] sm:$0xf]
    %v445 = vld [vmem:[%s4 + $0x88] sm:$0xf]
    %v446 = vld [vmem:[%s4 + $0x8c] sm:$0xf]
    %v447 = vld [vmem:[%s4 + $0x90] sm:$0xf]
    %v448 = vld [vmem:[%s4 + $0x94] sm:$0xf]
    %v449 = vld [vmem:[%s4 + $0x98] sm:$0xf]
    %v450 = vld [vmem:[%s4 + $0x9c] sm:$0xf]
    %v451 = vld [vmem:[%s4 + $0xa0] sm:$0xf]
    %v452 = vld [vmem:[%s4 + $0xa4] sm:$0xf]
    %v453 = vld [vmem:[%s4 + $0xa8] sm:$0xf]
    %v454 = vld [vmem:[%s4 + $0xac] sm:$0xf]
    %v455 = vld [vmem:[%s4 + $0xb0] sm:$0xf]
    %v456 = vld [vmem:[%s4 + $0xb4] sm:$0xf]
    %v457 = vld [vmem:[%s4 + $0xb8] sm:$0xf]
    %v458 = vld [vmem:[%s4 + $0xbc] sm:$0xf]
    %v459 = vld [vmem:[%s1] sm:$0xf]
    %v460 = vld [vmem:[%s1 + $0x4] sm:$0x1]
    %v461 = vld [vmem:[%s1 + $0x8] sm:$0xf]
    %v462 = vld [vmem:[%s1 + $0xc] sm:$0x1]
    %v467 = vunpack.c.l.b16 %v459
    %v468 = vunpack.c.l.b16 %v460
    %v469 = vunpack.c.l.b16 %v461
    %v470 = vunpack.c.l.b16 %v462
    %v471 = vpack.c.b16 %v468, %v467
    %v472 = vpack.c.b16 %v470, %v469
    %v474 = vshrl.u32 %v471, 16
    %v476 = vshll.u32 %v471, 16
    %v478 = vrot.slane %v476, 1
    %v479 = vor.u32 %v474, %v478
    %v481 = vshrl.u32 %v472, 16
    %v483 = vshll.u32 %v472, 16
    %v485 = vrot.slane %v483, 1
    %v486 = vor.u32 %v481, %v485
    %v487 = vrot.slane %v471, 1
    %v488 = vrot.slane %v472, 1
    %v489 = vunpack.c.l.b16 %v479
    %v490 = vunpack.c.l.b16 %v487
    %v491 = vunpack.c.l.b16 %v486
    %v492 = vunpack.c.l.b16 %v488
    %v493 = vld [vmem:[%s5] sm:$0xf]
    %v494 = vld [vmem:[%s5 + $0x4] sm:$0xf]
    %v495 = vld [vmem:[%s5 + $0x8] sm:$0xf]
    %v496 = vld [vmem:[%s5 + $0xc] sm:$0xf]
    %v497 = vld [vmem:[%s5 + $0x10] sm:$0xf]
    %v498 = vld [vmem:[%s5 + $0x14] sm:$0xf]
    %v499 = vld [vmem:[%s5 + $0x18] sm:$0xf]
    %v500 = vld [vmem:[%s5 + $0x1c] sm:$0xf]
    %v501 = vld [vmem:[%s5 + $0x20] sm:$0xf]
    %v502 = vld [vmem:[%s5 + $0x24] sm:$0xf]
    %v503 = vld [vmem:[%s5 + $0x28] sm:$0xf]
    %v504 = vld [vmem:[%s5 + $0x2c] sm:$0xf]
    %v505 = vld [vmem:[%s5 + $0x30] sm:$0xf]
    %v506 = vld [vmem:[%s5 + $0x34] sm:$0xf]
    %v507 = vld [vmem:[%s5 + $0x38] sm:$0xf]
    %v508 = vld [vmem:[%s5 + $0x3c] sm:$0xf]
    %v509 = vld [vmem:[%s5 + $0x40] sm:$0xf]
    %v510 = vld [vmem:[%s5 + $0x44] sm:$0xf]
    %v511 = vld [vmem:[%s5 + $0x48] sm:$0xf]
    %v512 = vld [vmem:[%s5 + $0x4c] sm:$0xf]
    %v513 = vld [vmem:[%s5 + $0x50] sm:$0xf]
    %v514 = vld [vmem:[%s5 + $0x54] sm:$0xf]
    %v515 = vld [vmem:[%s5 + $0x58] sm:$0xf]
    %v516 = vld [vmem:[%s5 + $0x5c] sm:$0xf]
    %v517 = vld [vmem:[%s5 + $0x60] sm:$0xf]
    %v518 = vld [vmem:[%s5 + $0x64] sm:$0xf]
    %v519 = vld [vmem:[%s5 + $0x68] sm:$0xf]
    %v520 = vld [vmem:[%s5 + $0x6c] sm:$0xf]
    %v521 = vld [vmem:[%s5 + $0x70] sm:$0xf]
    %v522 = vld [vmem:[%s5 + $0x74] sm:$0xf]
    %v523 = vld [vmem:[%s5 + $0x78] sm:$0xf]
    %v524 = vld [vmem:[%s5 + $0x7c] sm:$0xf]
    %v525 = vld [vmem:[%s5 + $0x80] sm:$0xf]
    %v526 = vld [vmem:[%s5 + $0x84] sm:$0xf]
    %v527 = vld [vmem:[%s5 + $0x88] sm:$0xf]
    %v528 = vld [vmem:[%s5 + $0x8c] sm:$0xf]
    %v529 = vld [vmem:[%s5 + $0x90] sm:$0xf]
    %v530 = vld [vmem:[%s5 + $0x94] sm:$0xf]
    %v531 = vld [vmem:[%s5 + $0x98] sm:$0xf]
    %v532 = vld [vmem:[%s5 + $0x9c] sm:$0xf]
    %v533 = vld [vmem:[%s5 + $0xa0] sm:$0xf]
    %v534 = vld [vmem:[%s5 + $0xa4] sm:$0xf]
    %v535 = vld [vmem:[%s5 + $0xa8] sm:$0xf]
    %v536 = vld [vmem:[%s5 + $0xac] sm:$0xf]
    %v537 = vld [vmem:[%s5 + $0xb0] sm:$0xf]
    %v538 = vld [vmem:[%s5 + $0xb4] sm:$0xf]
    %v539 = vld [vmem:[%s5 + $0xb8] sm:$0xf]
    %v540 = vld [vmem:[%s5 + $0xbc] sm:$0xf]
    %v541 = vpack.c.b16 %v469, %v467
    %v542 = vpack.c.b16 %v491, %v489
    %v543 = vpack.c.b16 %v492, %v490
    %v595 = vunpack.c.l.b16 %v493
    %v596 = vunpack.c.l.b16 %v494
    %v597 = vunpack.c.l.b16 %v495
    %v598 = vunpack.c.l.b16 %v496
    %v599 = vunpack.c.l.b16 %v497
    %v600 = vunpack.c.l.b16 %v498
    %v601 = vunpack.c.l.b16 %v499
    %v602 = vunpack.c.l.b16 %v500
    %v603 = vunpack.c.l.b16 %v501
    %v604 = vunpack.c.l.b16 %v502
    %v605 = vunpack.c.l.b16 %v503
    %v606 = vunpack.c.l.b16 %v504
    %v607 = vunpack.c.l.b16 %v505
    %v608 = vunpack.c.l.b16 %v506
    %v609 = vunpack.c.l.b16 %v507
    %v610 = vunpack.c.l.b16 %v508
    %v611 = vunpack.c.l.b16 %v509
    %v612 = vunpack.c.l.b16 %v510
    %v613 = vunpack.c.l.b16 %v511
    %v614 = vunpack.c.l.b16 %v512
    %v615 = vunpack.c.l.b16 %v513
    %v616 = vunpack.c.l.b16 %v514
    %v617 = vunpack.c.l.b16 %v515
    %v618 = vunpack.c.l.b16 %v516
    %v619 = vunpack.c.l.b16 %v517
    %v620 = vunpack.c.l.b16 %v518
    %v621 = vunpack.c.l.b16 %v519
    %v622 = vunpack.c.l.b16 %v520
    %v623 = vunpack.c.l.b16 %v521
    %v624 = vunpack.c.l.b16 %v522
    %v625 = vunpack.c.l.b16 %v523
    %v626 = vunpack.c.l.b16 %v524
    %v627 = vunpack.c.l.b16 %v525
    %v628 = vunpack.c.l.b16 %v526
    %v629 = vunpack.c.l.b16 %v527
    %v630 = vunpack.c.l.b16 %v528
    %v631 = vunpack.c.l.b16 %v529
    %v632 = vunpack.c.l.b16 %v530
    %v633 = vunpack.c.l.b16 %v531
    %v634 = vunpack.c.l.b16 %v532
    %v635 = vunpack.c.l.b16 %v533
    %v636 = vunpack.c.l.b16 %v534
    %v637 = vunpack.c.l.b16 %v535
    %v638 = vunpack.c.l.b16 %v536
    %v639 = vunpack.c.l.b16 %v537
    %v640 = vunpack.c.l.b16 %v538
    %v641 = vunpack.c.l.b16 %v539
    %v642 = vunpack.c.l.b16 %v540
    %v643 = vpack.c.b16 %v596, %v595
    %v644 = vpack.c.b16 %v598, %v597
    %v645 = vpack.c.b16 %v600, %v599
    %v646 = vpack.c.b16 %v602, %v601
    %v647 = vpack.c.b16 %v604, %v603
    %v648 = vpack.c.b16 %v606, %v605
    %v649 = vpack.c.b16 %v608, %v607
    %v650 = vpack.c.b16 %v610, %v609
    %v651 = vpack.c.b16 %v612, %v611
    %v652 = vpack.c.b16 %v614, %v613
    %v653 = vpack.c.b16 %v616, %v615
    %v654 = vpack.c.b16 %v618, %v617
    %v655 = vpack.c.b16 %v620, %v619
    %v656 = vpack.c.b16 %v622, %v621
    %v657 = vpack.c.b16 %v624, %v623
    %v658 = vpack.c.b16 %v626, %v625
    %v659 = vpack.c.b16 %v628, %v627
    %v660 = vpack.c.b16 %v630, %v629
    %v661 = vpack.c.b16 %v632, %v631
    %v662 = vpack.c.b16 %v634, %v633
    %v663 = vpack.c.b16 %v636, %v635
    %v664 = vpack.c.b16 %v638, %v637
    %v665 = vpack.c.b16 %v640, %v639
    %v666 = vpack.c.b16 %v642, %v641
    %691 = vmatprep.subr.bf16.mxu0 0
    %692 = vmatpush1.bf16.msra.mxu0 %v643
    %693 = vmatprep.subr.bf16.mxu0 0
    %694 = vmatpush1.bf16.msra.mxu0 %v644
    %695 = vmatprep.subr.bf16.mxu0 0
    %696 = vmatpush1.bf16.msra.mxu0 %v645
    %697 = vmatprep.subr.bf16.mxu0 0
    %698 = vmatpush1.bf16.msra.mxu0 %v646
    %699 = vmatprep.subr.bf16.mxu0 0
    %700 = vmatpush1.bf16.msra.mxu0 %v647
    %701 = vmatprep.subr.bf16.mxu0 0
    %702 = vmatpush1.bf16.msra.mxu0 %v648
    %703 = vmatprep.subr.bf16.mxu0 0
    %704 = vmatpush1.bf16.msra.mxu0 %v649
    %705 = vmatprep.subr.bf16.mxu0 0
    %706 = vmatpush1.bf16.msra.mxu0 %v650
    %707 = vmatprep.subr.bf16.mxu0 0
    %708 = vmatpush1.bf16.msra.mxu0 %v651
    %709 = vmatprep.subr.bf16.mxu0 0
    %710 = vmatpush1.bf16.msra.mxu0 %v652
    %711 = vmatprep.subr.bf16.mxu0 0
    %712 = vmatpush1.bf16.msra.mxu0 %v653
    %713 = vmatprep.subr.bf16.mxu0 0
    %714 = vmatpush1.bf16.msra.mxu0 %v654
    %715 = vmatprep.subr.bf16.mxu0 0
    %716 = vmatpush1.bf16.msra.mxu0 %v655
    %717 = vmatprep.subr.bf16.mxu0 0
    %718 = vmatpush1.bf16.msra.mxu0 %v656
    %719 = vmatprep.subr.bf16.mxu0 0
    %720 = vmatpush1.bf16.msra.mxu0 %v657
    %721 = vmatprep.subr.bf16.mxu0 0
    %722 = vmatpush1.bf16.msra.mxu0 %v658
    %723 = vmatprep.mubr.bf16.mxu0 %v542
    %724 = vmatmul.mubr.bf16.gmra.mrb[0].mxu0 %v541
    %v725 = vpop.f32.mrb[0].mxu0
    %v726 = vadd.f32 0.0, %v725
    %v727 = vpop.f32.mrb[0].mxu0
    %v728 = vpop.f32.mrb[0].mxu0
    %v729 = vadd.f32 0.0, %v728
    %v730 = vpop.f32.mrb[0].mxu0
    %731 = vdwg.mxu0
    %732 = vmatprep.subr.bf16.mxu0 0
    %733 = vmatpush1.bf16.msra.mxu0 %v659
    %734 = vmatprep.subr.bf16.mxu0 0
    %735 = vmatpush1.bf16.msra.mxu0 %v660
    %736 = vmatprep.subr.bf16.mxu0 0
    %737 = vmatpush1.bf16.msra.mxu0 %v661
    %738 = vmatprep.subr.bf16.mxu0 0
    %739 = vmatpush1.bf16.msra.mxu0 %v662
    %740 = vmatprep.subr.bf16.mxu0 0
    %741 = vmatpush1.bf16.msra.mxu0 %v663
    %742 = vmatprep.subr.bf16.mxu0 0
    %743 = vmatpush1.bf16.msra.mxu0 %v664
    %744 = vmatprep.subr.bf16.mxu0 0
    %745 = vmatpush1.bf16.msra.mxu0 %v665
    %746 = vmatprep.subr.bf16.mxu0 0
    %747 = vmatpush1.bf16.msra.mxu0 %v666
    %748 = vmatprep.subr.bf16.mxu0 0
    %749 = vmatpush1.bf16.msra.mxu0 0
    %750 = vmatprep.subr.bf16.mxu0 0
    %751 = vmatpush1.bf16.msra.mxu0 0
    %752 = vmatprep.subr.bf16.mxu0 0
    %753 = vmatpush1.bf16.msra.mxu0 0
    %754 = vmatprep.subr.bf16.mxu0 0
    %755 = vmatpush1.bf16.msra.mxu0 0
    %756 = vmatprep.subr.bf16.mxu0 0
    %757 = vmatpush1.bf16.msra.mxu0 0
    %758 = vmatprep.subr.bf16.mxu0 0
    %759 = vmatpush1.bf16.msra.mxu0 0
    %760 = vmatprep.subr.bf16.mxu0 0
    %761 = vmatpush1.bf16.msra.mxu0 0
    %762 = vmatprep.subr.bf16.mxu0 0
    %763 = vmatpush1.bf16.msra.mxu0 0
    %764 = vmatprep.mubr.bf16.mxu0 0
    %765 = vmatmul.mubr.bf16.gmra.mrb[0].mxu0 %v543
    %v766 = vpop.f32.mrb[0].mxu0
    %v767 = vadd.f32 %v726, %v766
    %v768 = vpop.f32.mrb[0].mxu0
    %v769 = vpop.f32.mrb[0].mxu0
    %v770 = vadd.f32 %v729, %v769
    %v771 = vpop.f32.mrb[0].mxu0
    %772 = vdwg.mxu0
    %v773 = vpack.c.b16 %v408, %v405
    %v774 = vpack.c.b16 %v409, %v406
    %v775 = vpack.c.b16 %v410, %v407
    %v827 = vunpack.c.l.b16 %v411
    %v828 = vunpack.c.l.b16 %v412
    %v829 = vunpack.c.l.b16 %v413
    %v830 = vunpack.c.l.b16 %v414
    %v831 = vunpack.c.l.b16 %v415
    %v832 = vunpack.c.l.b16 %v416
    %v833 = vunpack.c.l.b16 %v417
    %v834 = vunpack.c.l.b16 %v418
    %v835 = vunpack.c.l.b16 %v419
    %v836 = vunpack.c.l.b16 %v420
    %v837 = vunpack.c.l.b16 %v421
    %v838 = vunpack.c.l.b16 %v422
    %v839 = vunpack.c.l.b16 %v423
    %v840 = vunpack.c.l.b16 %v424
    %v841 = vunpack.c.l.b16 %v425
    %v842 = vunpack.c.l.b16 %v426
    %v843 = vunpack.c.l.b16 %v427
    %v844 = vunpack.c.l.b16 %v428
    %v845 = vunpack.c.l.b16 %v429
    %v846 = vunpack.c.l.b16 %v430
    %v847 = vunpack.c.l.b16 %v431
    %v848 = vunpack.c.l.b16 %v432
    %v849 = vunpack.c.l.b16 %v433
    %v850 = vunpack.c.l.b16 %v434
    %v851 = vunpack.c.l.b16 %v435
    %v852 = vunpack.c.l.b16 %v436
    %v853 = vunpack.c.l.b16 %v437
    %v854 = vunpack.c.l.b16 %v438
    %v855 = vunpack.c.l.b16 %v439
    %v856 = vunpack.c.l.b16 %v440
    %v857 = vunpack.c.l.b16 %v441
    %v858 = vunpack.c.l.b16 %v442
    %v859 = vunpack.c.l.b16 %v443
    %v860 = vunpack.c.l.b16 %v444
    %v861 = vunpack.c.l.b16 %v445
    %v862 = vunpack.c.l.b16 %v446
    %v863 = vunpack.c.l.b16 %v447
    %v864 = vunpack.c.l.b16 %v448
    %v865 = vunpack.c.l.b16 %v449
    %v866 = vunpack.c.l.b16 %v450
    %v867 = vunpack.c.l.b16 %v451
    %v868 = vunpack.c.l.b16 %v452
    %v869 = vunpack.c.l.b16 %v453
    %v870 = vunpack.c.l.b16 %v454
    %v871 = vunpack.c.l.b16 %v455
    %v872 = vunpack.c.l.b16 %v456
    %v873 = vunpack.c.l.b16 %v457
    %v874 = vunpack.c.l.b16 %v458
    %v875 = vpack.c.b16 %v828, %v827
    %v876 = vpack.c.b16 %v830, %v829
    %v877 = vpack.c.b16 %v832, %v831
    %v878 = vpack.c.b16 %v834, %v833
    %v879 = vpack.c.b16 %v836, %v835
    %v880 = vpack.c.b16 %v838, %v837
    %v881 = vpack.c.b16 %v840, %v839
    %v882 = vpack.c.b16 %v842, %v841
    %v883 = vpack.c.b16 %v844, %v843
    %v884 = vpack.c.b16 %v846, %v845
    %v885 = vpack.c.b16 %v848, %v847
    %v886 = vpack.c.b16 %v850, %v849
    %v887 = vpack.c.b16 %v852, %v851
    %v888 = vpack.c.b16 %v854, %v853
    %v889 = vpack.c.b16 %v856, %v855
    %v890 = vpack.c.b16 %v858, %v857
    %v891 = vpack.c.b16 %v860, %v859
    %v892 = vpack.c.b16 %v862, %v861
    %v893 = vpack.c.b16 %v864, %v863
    %v894 = vpack.c.b16 %v866, %v865
    %v895 = vpack.c.b16 %v868, %v867
    %v896 = vpack.c.b16 %v870, %v869
    %v897 = vpack.c.b16 %v872, %v871
    %v898 = vpack.c.b16 %v874, %v873
    %923 = vmatprep.subr.bf16.mxu0 0
    %924 = vmatpush1.bf16.msra.mxu0 %v875
    %925 = vmatprep.subr.bf16.mxu0 0
    %926 = vmatpush1.bf16.msra.mxu0 %v876
    %927 = vmatprep.subr.bf16.mxu0 0
    %928 = vmatpush1.bf16.msra.mxu0 %v877
    %929 = vmatprep.subr.bf16.mxu0 0
    %930 = vmatpush1.bf16.msra.mxu0 %v878
    %931 = vmatprep.subr.bf16.mxu0 0
    %932 = vmatpush1.bf16.msra.mxu0 %v879
    %933 = vmatprep.subr.bf16.mxu0 0
    %934 = vmatpush1.bf16.msra.mxu0 %v880
    %935 = vmatprep.subr.bf16.mxu0 0
    %936 = vmatpush1.bf16.msra.mxu0 %v881
    %937 = vmatprep.subr.bf16.mxu0 0
    %938 = vmatpush1.bf16.msra.mxu0 %v882
    %939 = vmatprep.subr.bf16.mxu0 0
    %940 = vmatpush1.bf16.msra.mxu0 %v883
    %941 = vmatprep.subr.bf16.mxu0 0
    %942 = vmatpush1.bf16.msra.mxu0 %v884
    %943 = vmatprep.subr.bf16.mxu0 0
    %944 = vmatpush1.bf16.msra.mxu0 %v885
    %945 = vmatprep.subr.bf16.mxu0 0
    %946 = vmatpush1.bf16.msra.mxu0 %v886
    %947 = vmatprep.subr.bf16.mxu0 0
    %948 = vmatpush1.bf16.msra.mxu0 %v887
    %949 = vmatprep.subr.bf16.mxu0 0
    %950 = vmatpush1.bf16.msra.mxu0 %v888
    %951 = vmatprep.subr.bf16.mxu0 0
    %952 = vmatpush1.bf16.msra.mxu0 %v889
    %953 = vmatprep.subr.bf16.mxu0 0
    %954 = vmatpush1.bf16.msra.mxu0 %v890
    %955 = vmatprep.mubr.bf16.mxu0 %v774
    %956 = vmatmul.mubr.bf16.gmra.mrb[0].mxu0 %v773
    %v957 = vpop.f32.mrb[0].mxu0
    %v958 = vadd.f32 %v767, %v957
    %v959 = vpop.f32.mrb[0].mxu0
    %v960 = vpop.f32.mrb[0].mxu0
    %v961 = vadd.f32 %v770, %v960
    %v962 = vpop.f32.mrb[0].mxu0
    %963 = vdwg.mxu0
    %964 = vmatprep.subr.bf16.mxu0 0
    %965 = vmatpush1.bf16.msra.mxu0 %v891
    %966 = vmatprep.subr.bf16.mxu0 0
    %967 = vmatpush1.bf16.msra.mxu0 %v892
    %968 = vmatprep.subr.bf16.mxu0 0
    %969 = vmatpush1.bf16.msra.mxu0 %v893
    %970 = vmatprep.subr.bf16.mxu0 0
    %971 = vmatpush1.bf16.msra.mxu0 %v894
    %972 = vmatprep.subr.bf16.mxu0 0
    %973 = vmatpush1.bf16.msra.mxu0 %v895
    %974 = vmatprep.subr.bf16.mxu0 0
    %975 = vmatpush1.bf16.msra.mxu0 %v896
    %976 = vmatprep.subr.bf16.mxu0 0
    %977 = vmatpush1.bf16.msra.mxu0 %v897
    %978 = vmatprep.subr.bf16.mxu0 0
    %979 = vmatpush1.bf16.msra.mxu0 %v898
    %980 = vmatprep.subr.bf16.mxu0 0
    %981 = vmatpush1.bf16.msra.mxu0 0
    %982 = vmatprep.subr.bf16.mxu0 0
    %983 = vmatpush1.bf16.msra.mxu0 0
    %984 = vmatprep.subr.bf16.mxu0 0
    %985 = vmatpush1.bf16.msra.mxu0 0
    %986 = vmatprep.subr.bf16.mxu0 0
    %987 = vmatpush1.bf16.msra.mxu0 0
    %988 = vmatprep.subr.bf16.mxu0 0
    %989 = vmatpush1.bf16.msra.mxu0 0
    %990 = vmatprep.subr.bf16.mxu0 0
    %991 = vmatpush1.bf16.msra.mxu0 0
    %992 = vmatprep.subr.bf16.mxu0 0
    %993 = vmatpush1.bf16.msra.mxu0 0
    %994 = vmatprep.subr.bf16.mxu0 0
    %995 = vmatpush1.bf16.msra.mxu0 0
    %996 = vmatprep.mubr.bf16.mxu0 0
    %997 = vmatmul.mubr.bf16.gmra.mrb[0].mxu0 %v775
    %v998 = vpop.f32.mrb[0].mxu0
    %v999 = vadd.f32 %v958, %v998
    %v1000 = vpop.f32.mrb[0].mxu0
    %v1001 = vpop.f32.mrb[0].mxu0
    %v1002 = vadd.f32 %v961, %v1001
    %v1003 = vpop.f32.mrb[0].mxu0
    %1004 = vdwg.mxu0
    %v1005 = vld [vmem:[%s6] sm:$0x1]
    %v1007 = vlaneseq
    %v1008 = vshrl.u32 %v1007, 7
    %v1009 = vsub.s32 0, %v1008
    %v1010 = vrot.slane %v1005, %v1009
    %v1012 = vadd.f32 %v999, %v1010
    %v1013 = vadd.f32 %v1002, %v1010
    %v1014 = vpack.c.bf16 %v1013, %v1012
    %v1015 = vld [vmem:[%s7] sm:$0xf]
    %v1016 = vld [vmem:[%s7 + $0x4] sm:$0xf]
    %v1017 = vld [vmem:[%s7 + $0x8] sm:$0xf]
    %v1018 = vld [vmem:[%s7 + $0xc] sm:$0xf]
    %v1019 = vld [vmem:[%s7 + $0x10] sm:$0xf]
    %v1020 = vld [vmem:[%s7 + $0x14] sm:$0xf]
    %v1021 = vld [vmem:[%s7 + $0x18] sm:$0xf]
    %v1022 = vld [vmem:[%s7 + $0x1c] sm:$0xf]
    %v1023 = vld [vmem:[%s7 + $0x20] sm:$0xf]
    %v1024 = vld [vmem:[%s7 + $0x24] sm:$0xf]
    %v1025 = vld [vmem:[%s7 + $0x28] sm:$0xf]
    %v1026 = vld [vmem:[%s7 + $0x2c] sm:$0xf]
    %v1027 = vld [vmem:[%s7 + $0x30] sm:$0xf]
    %v1028 = vld [vmem:[%s7 + $0x34] sm:$0xf]
    %v1029 = vld [vmem:[%s7 + $0x38] sm:$0xf]
    %v1030 = vld [vmem:[%s7 + $0x3c] sm:$0xf]
    %v1031 = vld [vmem:[%s8] sm:$0x1]
    %v1033 = vlaneseq
    %v1034 = vshrl.u32 %v1033, 7
    %v1035 = vsub.s32 0, %v1034
    %v1036 = vrot.slane %v1031, %v1035
    %v1054 = vunpack.c.l.b16 %v1015
    %v1055 = vunpack.c.l.b16 %v1016
    %v1056 = vunpack.c.l.b16 %v1017
    %v1057 = vunpack.c.l.b16 %v1018
    %v1058 = vunpack.c.l.b16 %v1019
    %v1059 = vunpack.c.l.b16 %v1020
    %v1060 = vunpack.c.l.b16 %v1021
    %v1061 = vunpack.c.l.b16 %v1022
    %v1062 = vunpack.c.l.b16 %v1023
    %v1063 = vunpack.c.l.b16 %v1024
    %v1064 = vunpack.c.l.b16 %v1025
    %v1065 = vunpack.c.l.b16 %v1026
    %v1066 = vunpack.c.l.b16 %v1027
    %v1067 = vunpack.c.l.b16 %v1028
    %v1068 = vunpack.c.l.b16 %v1029
    %v1069 = vunpack.c.l.b16 %v1030
    %v1070 = vpack.c.b16 %v1055, %v1054
    %v1071 = vpack.c.b16 %v1057, %v1056
    %v1072 = vpack.c.b16 %v1059, %v1058
    %v1073 = vpack.c.b16 %v1061, %v1060
    %v1074 = vpack.c.b16 %v1063, %v1062
    %v1075 = vpack.c.b16 %v1065, %v1064
    %v1076 = vpack.c.b16 %v1067, %v1066
    %v1077 = vpack.c.b16 %v1069, %v1068
    %1086 = vmatprep.subr.bf16.mxu0 0
    %1087 = vmatpush1.bf16.msra.mxu0 %v1070
    %1088 = vmatprep.subr.bf16.mxu0 0
    %1089 = vmatpush1.bf16.msra.mxu0 %v1071
    %1090 = vmatprep.subr.bf16.mxu0 0
    %1091 = vmatpush1.bf16.msra.mxu0 %v1072
    %1092 = vmatprep.subr.bf16.mxu0 0
    %1093 = vmatpush1.bf16.msra.mxu0 %v1073
    %1094 = vmatprep.subr.bf16.mxu0 0
    %1095 = vmatpush1.bf16.msra.mxu0 %v1074
    %1096 = vmatprep.subr.bf16.mxu0 0
    %1097 = vmatpush1.bf16.msra.mxu0 %v1075
    %1098 = vmatprep.subr.bf16.mxu0 0
    %1099 = vmatpush1.bf16.msra.mxu0 %v1076
    %1100 = vmatprep.subr.bf16.mxu0 0
    %1101 = vmatpush1.bf16.msra.mxu0 %v1077
    %1102 = vmatprep.subr.bf16.mxu0 0
    %1103 = vmatpush1.bf16.msra.mxu0 0
    %1104 = vmatprep.subr.bf16.mxu0 0
    %1105 = vmatpush1.bf16.msra.mxu0 0
    %1106 = vmatprep.subr.bf16.mxu0 0
    %1107 = vmatpush1.bf16.msra.mxu0 0
    %1108 = vmatprep.subr.bf16.mxu0 0
    %1109 = vmatpush1.bf16.msra.mxu0 0
    %1110 = vmatprep.subr.bf16.mxu0 0
    %1111 = vmatpush1.bf16.msra.mxu0 0
    %1112 = vmatprep.subr.bf16.mxu0 0
    %1113 = vmatpush1.bf16.msra.mxu0 0
    %1114 = vmatprep.subr.bf16.mxu0 0
    %1115 = vmatpush1.bf16.msra.mxu0 0
    %1116 = vmatprep.subr.bf16.mxu0 0
    %1117 = vmatpush1.bf16.msra.mxu0 0
    %1118 = vmatprep.mubr.bf16.mxu0 0
    %1119 = vmatmul.mubr.bf16.gmra.mrb[0].mxu0 %v1014
    %v1120 = vpop.f32.mrb[0].mxu0
    %v1121 = vadd.f32 %v1036, %v1120
    %v1122 = vpop.f32.mrb[0].mxu0
    %v1123 = vpop.f32.mrb[0].mxu0
    %v1124 = vadd.f32 %v1036, %v1123
    %v1125 = vpop.f32.mrb[0].mxu0
    %1126 = vdwg.mxu0
    %1127 = vst [vmem:[#allocation2] sm:$0xff] %v1121
    %1128 = vst [vmem:[#allocation2 + $0x8] sm:$0xff] %v1124
    // Predicated region
    $region38: #{cnn_seq2seq_forward.1} parent=1 // pred_check
      _
    $region39: #{cnn_seq2seq_forward.1} parent=1 // pred_check_branch
      %1130 = sbr.rel (0) target = $region41
    $region40: #{cnn_seq2seq_forward.1} parent=1 // pred_region
      %s1132 = ssub.s32 256, 256
      %1133 = vsyncadd [#allocation3], %s1132
      %s1134 = sshll.u32 [#allocation2], 4
      %s1135 = int_to_ptr.vmem [resolvable:$true] %s1134
      %1140 = dma.vmem_to_hbm [thread:$0]  %s1135, 256, %s9, [#allocation3], 128, 128, 8
    $region41: #{cnn_seq2seq_forward.1} parent=1 // pred_fallthru
      _
    // Predicated region
    $region42: #{cnn_seq2seq_forward.1} parent=1 // pred_check
      _
    $region43: #{cnn_seq2seq_forward.1} parent=1 // pred_check_branch
      %1142 = sbr.rel (0) target = $region45
    $region44: #{cnn_seq2seq_forward.1} parent=1 // pred_region
      %1143 = dma.done [#allocation3], 256
    $region45: #{cnn_seq2seq_forward.1} parent=1 // pred_fallthru
      _
    %1144 = vsyncpa [#allocation3], 1

</llo_original>
